<compile_context>
chip_gen: v7x
topology: tpu7x:2x2x1
jax: 0.10.0
libtpu: 0.0.40
codegen_flags: <defaults>
</compile_context>

<pallas_src>
import functools
import math

import jax
import jax.numpy as jnp
from jax.experimental import pallas as pl
from jax.experimental.pallas import tpu as pltpu


def _round_up(n: int, m: int) -> int:
    return ((n + m - 1) // m) * m


def _density_linear_kernel(
    x_ref,        # [TB, Dp] f32   input rows (batch tile)
    u_ref,        # [TB, Op] f32   uniform [0,1) noise (torch.rand_like)
    L_ref,        # [Dp, Dp] bf16  tril(L,-1)+I, zero-padded
    w_ref,        # [Op, Dp] bf16  nn.Linear weight (NOT transposed), zero-padded
    bias_ref,     # [1, Op]  f32   bias, zero-padded
    inv_var_ref,  # [1, Dp]  f32   exp(-logvar), zero-padded
    exp_s_ref,    # [1, Op]  f32   exp(s_logvar), zero-padded
    nb_ref,       # [1, Op]  f32   exp(b_logvar) * D / 2, zero-padded
    a_ref,        # out [TB, Op] f32
    ex_ref,       # out [TB, 1]  f32   Ex (loglikelihood finished in wrapper)
    *,
    d_orig: float,
):
    # bf16 operands for the MXU, f32 accumulation; elementwise stays f32.
    x_bf = x_ref[...].astype(jnp.bfloat16)

    # z = x @ (tril(L, -1) + I)
    z = jnp.dot(x_bf, L_ref[...], preferred_element_type=jnp.float32)

    # Ex = sum(z^2 / exp(logvar), axis=1, keepdims=True) / 2
    # (padding columns contribute 0: z_pad = 0 and inv_var_pad = 0)
    ex = 0.5 * jnp.sum(z * z * inv_var_ref[...], axis=1, keepdims=True)
    ex_ref[...] = ex

    # noise_var = exp(s_logvar) * clip(Ex, 0, D) + exp(b_logvar) * D / 2
    # Ex >= 0 by construction, so only the upper clip is needed.
    ex_c = jnp.minimum(ex, d_orig)
    noise_std = jnp.sqrt(exp_s_ref[...] * ex_c + nb_ref[...] + 1e-16)

    # a = x @ W^T + b  (contract dim 1 of x with dim 1 of W; no transpose op)
    a = jax.lax.dot_general(
        x_bf,
        w_ref[...],
        dimension_numbers=(((1,), (1,)), ((), ())),
        preferred_element_type=jnp.float32,
    )
    a_ref[...] = a + bias_ref[...] + noise_std * u_ref[...]


def density_linear_forward(x, params, key, *, noise=None, block_b=256):
    """Pallas forward of DensityLinear.

    Returns (a [B, O], loglikelihood [B]).
    `noise` may be a precomputed uniform-[0,1) array of shape [B, O]; if None it
    is drawn from `key` (matches torch.rand_like's distribution).
    """
    B, D = x.shape
    O = params["weight"].shape[0]

    # Lane padding (last dim multiple of 128) and sublane padding of the batch.
    Dp = _round_up(D, 128)
    Op = _round_up(O, 128)
    Bp = _round_up(B, 8)
    if Bp <= block_b:
        tb = Bp
    else:
        tb = block_b
        Bp = _round_up(B, tb)

    # ---- parameter-only precompute (hoisted out of the kernel) ----
    L = params["L"].astype(jnp.float32)
    L_eff = jnp.tril(L, k=-1) + jnp.eye(D, dtype=jnp.float32)
    logvar = params["logvar"].reshape(1, D).astype(jnp.float32)
    inv_var = jnp.exp(-logvar)
    ll_const = -0.5 * (D * math.log(2.0 * math.pi) + jnp.sum(logvar))
    exp_s = jnp.exp(params["s_logvar"].reshape(1, O).astype(jnp.float32))
    nb = jnp.exp(params["b_logvar"].reshape(1, O).astype(jnp.float32)) * (D / 2.0)
    bias = params["bias"].reshape(1, O).astype(jnp.float32)

    # ---- zero-pad to the lane-dense shapes (zeros leave results unchanged) ----
    xp = jnp.pad(x.astype(jnp.float32), ((0, Bp - B), (0, Dp - D)))
    Lp = jnp.pad(L_eff, ((0, Dp - D), (0, Dp - D))).astype(jnp.bfloat16)
    Wp = jnp.pad(
        params["weight"].astype(jnp.float32), ((0, Op - O), (0, Dp - D))
    ).astype(jnp.bfloat16)
    bp = jnp.pad(bias, ((0, 0), (0, Op - O)))
    ivp = jnp.pad(inv_var, ((0, 0), (0, Dp - D)))
    esp = jnp.pad(exp_s, ((0, 0), (0, Op - O)))
    nbp = jnp.pad(nb, ((0, 0), (0, Op - O)))

    if noise is None:
        u = jax.random.uniform(key, (Bp, Op), jnp.float32)
    else:
        u = jnp.pad(noise.astype(jnp.float32), ((0, Bp - B), (0, Op - O)))

    grid = (Bp // tb,)

    def batch_spec(cols):
        return pl.BlockSpec((tb, cols), lambda b: (b, 0))

    def param_spec(rows, cols):
        return pl.BlockSpec((rows, cols), lambda b: (0, 0))

    # Rough double-buffered VMEM budget, clamped to v7x's 64 MiB physical VMEM.
    vmem_bytes = 2 * (
        tb * Dp * 4 + 2 * tb * Op * 4 + tb * 4          # x, u, a, Ex
        + Dp * Dp * 2 + Op * Dp * 2                     # L_eff, W (bf16)
        + 4 * Op * 4 + Dp * 4                           # bias / exp vectors
    ) + (2 << 20)
    vmem_limit = int(min(max(vmem_bytes, 16 << 20), 64 << 20))

    kernel = functools.partial(_density_linear_kernel, d_orig=float(D))

    a_p, ex_p = pl.pallas_call(
        kernel,
        out_shape=(
            jax.ShapeDtypeStruct((Bp, Op), jnp.float32),
            jax.ShapeDtypeStruct((Bp, 1), jnp.float32),
        ),
        grid=grid,
        in_specs=[
            batch_spec(Dp),          # x
            batch_spec(Op),          # uniform noise
            param_spec(Dp, Dp),      # L_eff (bf16)
            param_spec(Op, Dp),      # weight (bf16)
            param_spec(1, Op),       # bias
            param_spec(1, Dp),       # exp(-logvar)
            param_spec(1, Op),       # exp(s_logvar)
            param_spec(1, Op),       # exp(b_logvar) * D / 2
        ],
        out_specs=(
            batch_spec(Op),                             # a
            pl.BlockSpec((tb, 1), lambda b: (b, 0)),    # Ex
        ),
        compiler_params=pltpu.CompilerParams(
            dimension_semantics=("parallel",),
            vmem_limit_bytes=vmem_limit,
        ),
    )(xp, u, Lp, Wp, bp, ivp, esp, nbp)

    a = a_p[:B, :O]
    loglikelihood = ll_const - ex_p[:B, 0]
    return a, loglikelihood


def init_density_linear_params(key, in_features, out_features,
                               prior_std=0.1, posterior_std_init=0.001):
    """Deterministic init mirroring DensityLinear.__init__ shapes/values."""
    k_w, k_b = jax.random.split(key)
    # nn.init.kaiming_normal_(weight): std = sqrt(2 / fan_in)
    w_std = math.sqrt(2.0 / in_features)
    weight = w_std * jax.random.normal(k_w, (out_features, in_features), jnp.float32)
    # nn.Linear default bias init: U(-1/sqrt(fan_in), 1/sqrt(fan_in))
    bound = 1.0 / math.sqrt(in_features)
    bias = jax.random.uniform(k_b, (out_features,), jnp.float32, -bound, bound)

    post_logvar = 2.0 * math.log(posterior_std_init)
    return {
        "weight": weight,
        "bias": bias,
        "s_logvar": post_logvar * jnp.ones((1, out_features), jnp.float32),
        "b_logvar": post_logvar * jnp.ones((1, out_features), jnp.float32),
        "L": jnp.zeros((in_features, in_features), jnp.float32),
        "logvar": jnp.zeros((1, in_features), jnp.float32),
        # prior buffers (only used for the KL term, not in forward)
        "s_prior_mu": jnp.zeros((1, out_features), jnp.float32),
        "s_prior_logvar": 2.0 * math.log(prior_std) * jnp.ones((1, out_features), jnp.float32),
        "b_prior_mu": jnp.zeros((1, out_features), jnp.float32),
        "b_prior_logvar": 2.0 * math.log(prior_std) * jnp.ones((1, out_features), jnp.float32),
    }


def _reference_forward(x, params, noise):
    """Pure-JAX f32 reference of DensityLinear.forward (same noise array)."""
    D = x.shape[1]
    L = jnp.tril(params["L"], k=-1) + jnp.eye(D, dtype=jnp.float32)
    z = x @ L
    Ex = 0.5 * jnp.sum(z * z / jnp.exp(params["logvar"]), axis=1, keepdims=True)
    ll = (-0.5 * (D * math.log(2.0 * math.pi) + jnp.sum(params["logvar"]))
          - jnp.mean(Ex, axis=1))
    Ex_c = jnp.clip(Ex, 0.0, float(D))
    noise_var = jnp.exp(params["s_logvar"]) * Ex_c + jnp.exp(params["b_logvar"]) * D / 2.0
    noise_std = jnp.sqrt(noise_var + 1e-16)
    a = x @ params["weight"].T + params["bias"][None, :]
    return a + noise_std * noise, ll


if __name__ == "__main__":
    key = jax.random.PRNGKey(0)
    k_x, k_p, k_l, k_v, k_n = jax.random.split(key, 5)

    batch, in_features, out_features = 8, 32, 32
    x = jax.random.normal(k_x, (batch, in_features), jnp.float32)
    params = init_density_linear_params(k_p, in_features, out_features)
    # Perturb L / logvar so the tril masking and 1/exp(logvar) paths are exercised.
    params["L"] = 0.1 * jax.random.normal(k_l, (in_features, in_features), jnp.float32)
    params["logvar"] = 0.1 * jax.random.normal(k_v, (1, in_features), jnp.float32)

    # Same uniform [0,1) noise for kernel and reference.
    u_noise = jax.random.uniform(k_n, (batch, out_features), jnp.float32)

    a, loglikelihood = density_linear_forward(x, params, k_n, noise=u_noise)
    jax.block_until_ready(a)
    jax.block_until_ready(loglikelihood)

    assert a.shape == (batch, out_features)
    assert loglikelihood.shape == (batch,)
    assert bool(jnp.all(jnp.isfinite(a)))
    assert bool(jnp.all(jnp.isfinite(loglikelihood)))

    a_ref, ll_ref = _reference_forward(x, params, u_noise)
    # bf16 MXU operands (f32 accumulate) -> loose tolerances vs the f32 reference.
    assert bool(jnp.allclose(a, a_ref, rtol=5e-2, atol=1e-1)), "output mismatch"
    assert bool(jnp.allclose(loglikelihood, ll_ref, rtol=5e-2, atol=5e-1)), "loglik mismatch"

    print("KERNEL_OK")
</pallas_src>

<mosaic_0001>
module attributes {stable_mosaic.version = 11 : i64} {
  func.func @_density_linear_kernel(%arg0: i32, %arg1: memref<8x128xf32, #tpu.memory_space<vmem>>, %arg2: memref<8x128xf32, #tpu.memory_space<vmem>>, %arg3: memref<128x128xbf16, #tpu.memory_space<vmem>>, %arg4: memref<128x128xbf16, #tpu.memory_space<vmem>>, %arg5: memref<1x128xf32, #tpu.memory_space<vmem>>, %arg6: memref<1x128xf32, #tpu.memory_space<vmem>>, %arg7: memref<1x128xf32, #tpu.memory_space<vmem>>, %arg8: memref<1x128xf32, #tpu.memory_space<vmem>>, %arg9: memref<8x128xf32, #tpu.memory_space<vmem>>, %arg10: memref<8x1xf32, #tpu.memory_space<vmem>>) attributes {dimension_semantics = [#tpu.dimension_semantics<parallel>], iteration_bounds = array<i64: 1>, scalar_prefetch = 0 : i64, scratch_operands = 0 : i64, tpu.core_type = #tpu.core_type<tc>, window_params = [{transform_indices = @transform_0, window_bounds = array<i64: 8, 128>}, {transform_indices = @transform_1, window_bounds = array<i64: 8, 128>}, {pipeline_mode = #tpu.pipeline_mode<synchronous>, transform_indices = @transform_2, window_bounds = array<i64: 128, 128>}, {pipeline_mode = #tpu.pipeline_mode<synchronous>, transform_indices = @transform_3, window_bounds = array<i64: 128, 128>}, {pipeline_mode = #tpu.pipeline_mode<synchronous>, transform_indices = @transform_4, window_bounds = array<i64: 1, 128>}, {pipeline_mode = #tpu.pipeline_mode<synchronous>, transform_indices = @transform_5, window_bounds = array<i64: 1, 128>}, {pipeline_mode = #tpu.pipeline_mode<synchronous>, transform_indices = @transform_6, window_bounds = array<i64: 1, 128>}, {pipeline_mode = #tpu.pipeline_mode<synchronous>, transform_indices = @transform_7, window_bounds = array<i64: 1, 128>}, {transform_indices = @transform_8, window_bounds = array<i64: 8, 128>}, {transform_indices = @transform_9, window_bounds = array<i64: 8, 1>}]} {
    %c0 = arith.constant 0 : index
    %c0_0 = arith.constant 0 : index
    %0 = vector.load %arg1[%c0, %c0_0] : memref<8x128xf32, #tpu.memory_space<vmem>>, vector<8x128xf32>
    %1 = arith.truncf %0 : vector<8x128xf32> to vector<8x128xbf16>
    %c0_1 = arith.constant 0 : index
    %c0_2 = arith.constant 0 : index
    %2 = vector.load %arg3[%c0_1, %c0_2] : memref<128x128xbf16, #tpu.memory_space<vmem>>, vector<128x128xbf16>
    %cst = arith.constant dense<0.000000e+00> : vector<8x128xf32>
    %3 = tpu.matmul %1, %2, %cst {dimension_numbers = #tpu.dot_dimension_numbers<[1], [0], [0], [1], [0, 0, 1, 1], [], []>} : vector<8x128xbf16>, vector<128x128xbf16>, vector<8x128xf32> -> vector<8x128xf32>
    %4 = arith.mulf %3, %3 : vector<8x128xf32>
    %c0_3 = arith.constant 0 : index
    %c0_4 = arith.constant 0 : index
    %5 = vector.load %arg6[%c0_3, %c0_4] : memref<1x128xf32, #tpu.memory_space<vmem>>, vector<1x128xf32>
    %6 = vector.broadcast %5 : vector<1x128xf32> to vector<8x128xf32>
    %7 = arith.mulf %4, %6 : vector<8x128xf32>
    %cst_5 = arith.constant dense<0.000000e+00> : vector<8xf32>
    %8 = vector.multi_reduction <add>, %7, %cst_5 [1] : vector<8x128xf32> to vector<8xf32>
    %9 = vector.shape_cast %8 : vector<8xf32> to vector<8x1xf32>
    %cst_6 = arith.constant 5.000000e-01 : f32
    %10 = vector.broadcast %cst_6 : f32 to vector<8x1xf32>
    %11 = arith.mulf %10, %9 : vector<8x1xf32>
    %c0_7 = arith.constant 0 : index
    %c0_8 = arith.constant 0 : index
    %12 = vector.load %arg10[%c0_7, %c0_8] : memref<8x1xf32, #tpu.memory_space<vmem>>, vector<8x1xf32>
    tpu.vector_store %arg10[%c0_7, %c0_8], %11 {strides = array<i32>} : memref<8x1xf32, #tpu.memory_space<vmem>>, vector<8x1xf32>,
    %cst_9 = arith.constant 3.200000e+01 : f32
    %13 = vector.broadcast %cst_9 : f32 to vector<8x1xf32>
    %14 = arith.minimumf %11, %13 : vector<8x1xf32>
    %c0_10 = arith.constant 0 : index
    %c0_11 = arith.constant 0 : index
    %15 = vector.load %arg7[%c0_10, %c0_11] : memref<1x128xf32, #tpu.memory_space<vmem>>, vector<1x128xf32>
    %16 = vector.broadcast %15 : vector<1x128xf32> to vector<8x128xf32>
    %17 = vector.broadcast %14 : vector<8x1xf32> to vector<8x128xf32>
    %18 = arith.mulf %16, %17 : vector<8x128xf32>
    %c0_12 = arith.constant 0 : index
    %c0_13 = arith.constant 0 : index
    %19 = vector.load %arg8[%c0_12, %c0_13] : memref<1x128xf32, #tpu.memory_space<vmem>>, vector<1x128xf32>
    %20 = vector.broadcast %19 : vector<1x128xf32> to vector<8x128xf32>
    %21 = arith.addf %18, %20 : vector<8x128xf32>
    %cst_14 = arith.constant 1.000000e-16 : f32
    %22 = vector.broadcast %cst_14 : f32 to vector<8x128xf32>
    %23 = arith.addf %21, %22 : vector<8x128xf32>
    %24 = math.sqrt %23 : vector<8x128xf32>
    %c0_15 = arith.constant 0 : index
    %c0_16 = arith.constant 0 : index
    %25 = vector.load %arg4[%c0_15, %c0_16] : memref<128x128xbf16, #tpu.memory_space<vmem>>, vector<128x128xbf16>
    %cst_17 = arith.constant dense<0.000000e+00> : vector<8x128xf32>
    %26 = tpu.matmul %1, %25, %cst_17 {dimension_numbers = #tpu.dot_dimension_numbers<[1], [1], [0], [0], [0, 0, 1, 0], [], []>} : vector<8x128xbf16>, vector<128x128xbf16>, vector<8x128xf32> -> vector<8x128xf32>
    %c0_18 = arith.constant 0 : index
    %c0_19 = arith.constant 0 : index
    %27 = vector.load %arg5[%c0_18, %c0_19] : memref<1x128xf32, #tpu.memory_space<vmem>>, vector<1x128xf32>
    %28 = vector.broadcast %27 : vector<1x128xf32> to vector<8x128xf32>
    %29 = arith.addf %26, %28 : vector<8x128xf32>
    %c0_20 = arith.constant 0 : index
    %c0_21 = arith.constant 0 : index
    %30 = vector.load %arg2[%c0_20, %c0_21] : memref<8x128xf32, #tpu.memory_space<vmem>>, vector<8x128xf32>
    %31 = arith.mulf %24, %30 : vector<8x128xf32>
    %32 = arith.addf %29, %31 : vector<8x128xf32>
    %c0_22 = arith.constant 0 : index
    %c0_23 = arith.constant 0 : index
    %33 = vector.load %arg9[%c0_22, %c0_23] : memref<8x128xf32, #tpu.memory_space<vmem>>, vector<8x128xf32>
    tpu.vector_store %arg9[%c0_22, %c0_23], %32 {strides = array<i32>} : memref<8x128xf32, #tpu.memory_space<vmem>>, vector<8x128xf32>,
    return
  }
  func.func @transform_0(%arg0: i32) -> (i32, i32) {
    %c0_i32 = arith.constant 0 : i32
    %c0_i32_0 = arith.constant 0 : i32
    return %arg0, %c0_i32 : i32, i32
  }
  func.func @transform_1(%arg0: i32) -> (i32, i32) {
    %c0_i32 = arith.constant 0 : i32
    %c0_i32_0 = arith.constant 0 : i32
    return %arg0, %c0_i32 : i32, i32
  }
  func.func @transform_2(%arg0: i32) -> (i32, i32) {
    %c0_i32 = arith.constant 0 : i32
    %c0_i32_0 = arith.constant 0 : i32
    %c0_i32_1 = arith.constant 0 : i32
    return %c0_i32, %c0_i32_0 : i32, i32
  }
  func.func @transform_3(%arg0: i32) -> (i32, i32) {
    %c0_i32 = arith.constant 0 : i32
    %c0_i32_0 = arith.constant 0 : i32
    %c0_i32_1 = arith.constant 0 : i32
    return %c0_i32, %c0_i32_0 : i32, i32
  }
  func.func @transform_4(%arg0: i32) -> (i32, i32) {
    %c0_i32 = arith.constant 0 : i32
    %c0_i32_0 = arith.constant 0 : i32
    %c0_i32_1 = arith.constant 0 : i32
    return %c0_i32, %c0_i32_0 : i32, i32
  }
  func.func @transform_5(%arg0: i32) -> (i32, i32) {
    %c0_i32 = arith.constant 0 : i32
    %c0_i32_0 = arith.constant 0 : i32
    %c0_i32_1 = arith.constant 0 : i32
    return %c0_i32, %c0_i32_0 : i32, i32
  }
  func.func @transform_6(%arg0: i32) -> (i32, i32) {
    %c0_i32 = arith.constant 0 : i32
    %c0_i32_0 = arith.constant 0 : i32
    %c0_i32_1 = arith.constant 0 : i32
    return %c0_i32, %c0_i32_0 : i32, i32
  }
  func.func @transform_7(%arg0: i32) -> (i32, i32) {
    %c0_i32 = arith.constant 0 : i32
    %c0_i32_0 = arith.constant 0 : i32
    %c0_i32_1 = arith.constant 0 : i32
    return %c0_i32, %c0_i32_0 : i32, i32
  }
  func.func @transform_8(%arg0: i32) -> (i32, i32) {
    %c0_i32 = arith.constant 0 : i32
    %c0_i32_0 = arith.constant 0 : i32
    return %arg0, %c0_i32 : i32, i32
  }
  func.func @transform_9(%arg0: i32) -> (i32, i32) {
    %c0_i32 = arith.constant 0 : i32
    %c0_i32_0 = arith.constant 0 : i32
    return %arg0, %c0_i32 : i32, i32
  }
}

</mosaic_0001>

<llo_original>
// kernel: tpu_custom_call.1
$region0: #{tpu_custom_call.1}
  #allocation0 [shape = 'u32[]', space=smem, size = 0x4, offset = 0x4, fixed_abs, tag = 'smem constant byte address 0x4 - core index']
  #allocation1 [shape = 'u32[144,128]{1,0:T(1,128)}', space=vmem, size = 0x12000, scoped, tag = 'internal scratch']
  %s0 = inlined_call_operand.hbm [shape: f32[8,128], index: 0, kind: input, shape index: {}]
  %s1 = inlined_call_operand.hbm [shape: f32[8,128], index: 1, kind: input, shape index: {}]
  %s2 = inlined_call_operand.hbm [shape: bf16[128,128], index: 2, kind: input, shape index: {}]
  %s3 = inlined_call_operand.hbm [shape: bf16[128,128], index: 3, kind: input, shape index: {}]
  %s4 = inlined_call_operand.vmem [shape: f32[1,128], index: 4, kind: input, shape index: {}]
  %s5 = inlined_call_operand.vmem [shape: f32[1,128], index: 5, kind: input, shape index: {}]
  %s6 = inlined_call_operand.vmem [shape: f32[1,128], index: 6, kind: input, shape index: {}]
  %s7 = inlined_call_operand.vmem [shape: f32[1,128], index: 7, kind: input, shape index: {}]
  %s8 = inlined_call_operand.hbm [shape: f32[8,128], index: 8, kind: output, shape index: {0}]
  %s9 = inlined_call_operand.vmem [shape: f32[8,1], index: 9, kind: output, shape index: {1}]
  %10 = xla_tuple %s8, %s9
  %s11 = sld [smem:[#allocation0]]
  $region66: #{tpu_custom_call.1} parent=0
    _
  %s13 = ssub.s32 1, %s11
  %s14 = scalar_select 0, %s13, %s11
  $region1: #{tpu_custom_call.1} parent=0
    #allocation2 [shape = 'u8[4096]{0}', space=vmem, size = 0x1000, scoped, tag = 'input window, operand 0, single buffered']
    #allocation3 [shape = 's32[1]{0}', space=sflag, size = 0x4, scoped, tag = 'scoped memory for tpu_custom_call.1']
    #allocation4 [shape = 's32[1]{0}', space=sflag, size = 0x4, scoped, tag = 'scoped memory for tpu_custom_call.1']
    #allocation5 [shape = 'u8[4096]{0}', space=vmem, size = 0x1000, scoped, tag = 'input window, operand 1, single buffered']
    #allocation6 [shape = 's32[1]{0}', space=sflag, size = 0x4, scoped, tag = 'scoped memory for tpu_custom_call.1']
    #allocation7 [shape = 'u8[32768]{0}', space=vmem, size = 0x8000, scoped, tag = 'input window, operand 2, single buffered']
    #allocation8 [shape = 'u8[32768]{0}', space=vmem, size = 0x8000, scoped, tag = 'input window, operand 3, single buffered']
    #allocation9 [shape = 's32[1]{0}', space=sflag, size = 0x4, scoped, tag = 'scoped memory for tpu_custom_call.1']
    #allocation10 [shape = 'u8[4096]{0}', space=vmem, size = 0x1000, scoped, tag = 'output window, operand 0, single buffered']
    %15 = vsyncpa [#allocation3], 0
    %16 = vsyncpa [#allocation6], 0
    %17 = vsyncpa [#allocation9], 0
    %18 = vsyncpa [#allocation4], 0
    // Predicated region
    $region2: #{tpu_custom_call.1} parent=1 // pred_check
      _
    $region3: #{tpu_custom_call.1} parent=1 // pred_check_branch
      %20 = sbr.rel (0) target = $region5
    $region4: #{tpu_custom_call.1} parent=1 // pred_region
      %s22 = ssub.s32 128, 128
      %23 = vsyncadd [#allocation3], %s22
      %s25 = sshll.u32 [#allocation2], 4
      %s26 = int_to_ptr.vmem [resolvable:$true] %s25
      %28 = dma.hbm_to_vmem [thread:$0]  %s0, 128, %s26, [#allocation3]
    $region5: #{tpu_custom_call.1} parent=1 // pred_fallthru
      _
    // Predicated region
    $region6: #{tpu_custom_call.1} parent=1 // pred_check
      _
    $region7: #{tpu_custom_call.1} parent=1 // pred_check_branch
      %30 = sbr.rel (0) target = $region9
    $region8: #{tpu_custom_call.1} parent=1 // pred_region
      %s32 = ssub.s32 128, 128
      %33 = vsyncadd [#allocation6], %s32
      %s35 = sshll.u32 [#allocation5], 4
      %s36 = int_to_ptr.vmem [resolvable:$true] %s35
      %38 = dma.hbm_to_vmem [thread:$0]  %s1, 128, %s36, [#allocation6]
    $region9: #{tpu_custom_call.1} parent=1 // pred_fallthru
      _
    // Predicated region
    $region10: #{tpu_custom_call.1} parent=1 // pred_check
      _
    $region11: #{tpu_custom_call.1} parent=1 // pred_check_branch
      %40 = sbr.rel (0) target = $region13
    $region12: #{tpu_custom_call.1} parent=1 // pred_region
      %s42 = ssub.s32 1024, 1024
      %43 = vsyncadd [#allocation6], %s42
      %s44 = sshll.u32 [#allocation7], 4
      %s45 = int_to_ptr.vmem [resolvable:$true] %s44
      %50 = dma.hbm_to_vmem [thread:$0]  %s2, 1024, %s45, [#allocation6], 64, 64, 4
    $region13: #{tpu_custom_call.1} parent=1 // pred_fallthru
      _
    // Predicated region
    $region14: #{tpu_custom_call.1} parent=1 // pred_check
      _
    $region15: #{tpu_custom_call.1} parent=1 // pred_check_branch
      %52 = sbr.rel (0) target = $region17
    $region16: #{tpu_custom_call.1} parent=1 // pred_region
      %s54 = ssub.s32 1024, 1024
      %55 = vsyncadd [#allocation9], %s54
      %s56 = sshll.u32 [#allocation8], 4
      %s57 = int_to_ptr.vmem [resolvable:$true] %s56
      %62 = dma.hbm_to_vmem [thread:$0]  %s3, 1024, %s57, [#allocation9], 64, 64, 4
    $region17: #{tpu_custom_call.1} parent=1 // pred_fallthru
      _
    // Predicated region
    $region18: #{tpu_custom_call.1} parent=1 // pred_check
      _
    $region19: #{tpu_custom_call.1} parent=1 // pred_check_branch
      %64 = sbr.rel (0) target = $region21
    $region20: #{tpu_custom_call.1} parent=1 // pred_region
      _
    $region21: #{tpu_custom_call.1} parent=1 // pred_fallthru
      _
    // Predicated region
    $region22: #{tpu_custom_call.1} parent=1 // pred_check
      _
    $region23: #{tpu_custom_call.1} parent=1 // pred_check_branch
      %66 = sbr.rel (0) target = $region25
    $region24: #{tpu_custom_call.1} parent=1 // pred_region
      _
    $region25: #{tpu_custom_call.1} parent=1 // pred_fallthru
      _
    // Predicated region
    $region26: #{tpu_custom_call.1} parent=1 // pred_check
      _
    $region27: #{tpu_custom_call.1} parent=1 // pred_check_branch
      %68 = sbr.rel (0) target = $region29
    $region28: #{tpu_custom_call.1} parent=1 // pred_region
      _
    $region29: #{tpu_custom_call.1} parent=1 // pred_fallthru
      _
    // Predicated region
    $region30: #{tpu_custom_call.1} parent=1 // pred_check
      _
    $region31: #{tpu_custom_call.1} parent=1 // pred_check_branch
      %70 = sbr.rel (0) target = $region33
    $region32: #{tpu_custom_call.1} parent=1 // pred_region
      _
    $region33: #{tpu_custom_call.1} parent=1 // pred_fallthru
      _
    // Predicated region
    $region34: #{tpu_custom_call.1} parent=1 // pred_check
      _
    $region35: #{tpu_custom_call.1} parent=1 // pred_check_branch
      %72 = sbr.rel (0) target = $region37
    $region36: #{tpu_custom_call.1} parent=1 // pred_region
      %73 = dma.done [#allocation3], 128
    $region37: #{tpu_custom_call.1} parent=1 // pred_fallthru
      _
    // Predicated region
    $region38: #{tpu_custom_call.1} parent=1 // pred_check
      _
    $region39: #{tpu_custom_call.1} parent=1 // pred_check_branch
      %75 = sbr.rel (0) target = $region41
    $region40: #{tpu_custom_call.1} parent=1 // pred_region
      %76 = dma.done [#allocation6], 128
    $region41: #{tpu_custom_call.1} parent=1 // pred_fallthru
      _
    // Predicated region
    $region42: #{tpu_custom_call.1} parent=1 // pred_check
      _
    $region43: #{tpu_custom_call.1} parent=1 // pred_check_branch
      %78 = sbr.rel (0) target = $region45
    $region44: #{tpu_custom_call.1} parent=1 // pred_region
      %79 = dma.done [#allocation6], 1024
    $region45: #{tpu_custom_call.1} parent=1 // pred_fallthru
      _
    // Predicated region
    $region46: #{tpu_custom_call.1} parent=1 // pred_check
      _
    $region47: #{tpu_custom_call.1} parent=1 // pred_check_branch
      %81 = sbr.rel (0) target = $region49
    $region48: #{tpu_custom_call.1} parent=1 // pred_region
      %82 = dma.done [#allocation9], 1024
    $region49: #{tpu_custom_call.1} parent=1 // pred_fallthru
      _
    %v84 = vld [vmem:[#allocation2] sm:$0xff]
    %v85 = vpack.c.bf16 %v84, %v84
    %v86 = vld [vmem:[#allocation7] sm:$0xf]
    %v87 = vld [vmem:[#allocation7 + $0x4] sm:$0xf]
    %v88 = vld [vmem:[#allocation7 + $0x8] sm:$0xf]
    %v89 = vld [vmem:[#allocation7 + $0xc] sm:$0xf]
    %v90 = vld [vmem:[#allocation7 + $0x10] sm:$0xf]
    %v91 = vld [vmem:[#allocation7 + $0x14] sm:$0xf]
    %v92 = vld [vmem:[#allocation7 + $0x18] sm:$0xf]
    %v93 = vld [vmem:[#allocation7 + $0x1c] sm:$0xf]
    %v94 = vld [vmem:[#allocation7 + $0x20] sm:$0xf]
    %v95 = vld [vmem:[#allocation7 + $0x24] sm:$0xf]
    %v96 = vld [vmem:[#allocation7 + $0x28] sm:$0xf]
    %v97 = vld [vmem:[#allocation7 + $0x2c] sm:$0xf]
    %v98 = vld [vmem:[#allocation7 + $0x30] sm:$0xf]
    %v99 = vld [vmem:[#allocation7 + $0x34] sm:$0xf]
    %v100 = vld [vmem:[#allocation7 + $0x38] sm:$0xf]
    %v101 = vld [vmem:[#allocation7 + $0x3c] sm:$0xf]
    %v118 = vunpack.c.l.b16 %v86
    %v119 = vunpack.c.l.b16 %v87
    %v120 = vunpack.c.l.b16 %v88
    %v121 = vunpack.c.l.b16 %v89
    %v122 = vunpack.c.l.b16 %v90
    %v123 = vunpack.c.l.b16 %v91
    %v124 = vunpack.c.l.b16 %v92
    %v125 = vunpack.c.l.b16 %v93
    %v126 = vunpack.c.l.b16 %v94
    %v127 = vunpack.c.l.b16 %v95
    %v128 = vunpack.c.l.b16 %v96
    %v129 = vunpack.c.l.b16 %v97
    %v130 = vunpack.c.l.b16 %v98
    %v131 = vunpack.c.l.b16 %v99
    %v132 = vunpack.c.l.b16 %v100
    %v133 = vunpack.c.l.b16 %v101
    %v134 = vpack.c.b16 %v119, %v118
    %v135 = vpack.c.b16 %v121, %v120
    %v136 = vpack.c.b16 %v123, %v122
    %v137 = vpack.c.b16 %v125, %v124
    %v138 = vpack.c.b16 %v127, %v126
    %v139 = vpack.c.b16 %v129, %v128
    %v140 = vpack.c.b16 %v131, %v130
    %v141 = vpack.c.b16 %v133, %v132
    %150 = vmatprep.subr.bf16.mxu0 0
    %151 = vmatpush1.bf16.msra.mxu0 %v134
    %152 = vmatprep.subr.bf16.mxu0 0
    %153 = vmatpush1.bf16.msra.mxu0 %v135
    %154 = vmatprep.subr.bf16.mxu0 0
    %155 = vmatpush1.bf16.msra.mxu0 %v136
    %156 = vmatprep.subr.bf16.mxu0 0
    %157 = vmatpush1.bf16.msra.mxu0 %v137
    %158 = vmatprep.subr.bf16.mxu0 0
    %159 = vmatpush1.bf16.msra.mxu0 %v138
    %160 = vmatprep.subr.bf16.mxu0 0
    %161 = vmatpush1.bf16.msra.mxu0 %v139
    %162 = vmatprep.subr.bf16.mxu0 0
    %163 = vmatpush1.bf16.msra.mxu0 %v140
    %164 = vmatprep.subr.bf16.mxu0 0
    %165 = vmatpush1.bf16.msra.mxu0 %v141
    %166 = vmatprep.subr.bf16.mxu0 0
    %167 = vmatpush1.bf16.msra.mxu0 0
    %168 = vmatprep.subr.bf16.mxu0 0
    %169 = vmatpush1.bf16.msra.mxu0 0
    %170 = vmatprep.subr.bf16.mxu0 0
    %171 = vmatpush1.bf16.msra.mxu0 0
    %172 = vmatprep.subr.bf16.mxu0 0
    %173 = vmatpush1.bf16.msra.mxu0 0
    %174 = vmatprep.subr.bf16.mxu0 0
    %175 = vmatpush1.bf16.msra.mxu0 0
    %176 = vmatprep.subr.bf16.mxu0 0
    %177 = vmatpush1.bf16.msra.mxu0 0
    %178 = vmatprep.subr.bf16.mxu0 0
    %179 = vmatpush1.bf16.msra.mxu0 0
    %180 = vmatprep.subr.bf16.mxu0 0
    %181 = vmatpush1.bf16.msra.mxu0 0
    %182 = vmatprep.mubr.bf16.mxu0 0
    %183 = vmatmul.mubr.bf16.gmra.mrb[0].mxu0 %v85
    %v184 = vpop.f32.mrb[0].mxu0
    %v185 = vadd.f32 0.0, %v184
    %v186 = vpop.f32.mrb[0].mxu0
    %v187 = vpop.f32.mrb[0].mxu0
    %v188 = vpop.f32.mrb[0].mxu0
    %189 = vdwg.mxu0
    %v190 = vmul.f32 %v185, %v185
    %v191 = vld [vmem:[%s5] sm:$0x1]
    %v193 = vlaneseq
    %v194 = vshrl.u32 %v193, 7
    %v195 = vsub.s32 0, %v194
    %v196 = vrot.slane %v191, %v195
    %v198 = vmul.f32 %v190, %v196
    %199 = vadd.xlane.f32.xlu0 %v198
    %v200 = vpop.xlane.xlu0 %199
    %v201 = vmul.f32 %v200, 0.5
    %vm202 = vcmask 7168
    %203 = vst.msk [vmem:[%s9] sm:$0xff] %vm202, %v201
    %v204 = vmin.f32 %v201, 32.0
    %v205 = vld [vmem:[%s6] sm:$0x1]
    %v207 = vlaneseq
    %v208 = vshrl.u32 %v207, 7
    %v209 = vsub.s32 0, %v208
    %v210 = vrot.slane %v205, %v209
    %v212 = vmul.f32 %v210, %v204
    %v213 = vld [vmem:[%s7] sm:$0x1]
    %v215 = vlaneseq
    %v216 = vshrl.u32 %v215, 7
    %v217 = vsub.s32 0, %v216
    %v218 = vrot.slane %v213, %v217
    %v220 = vadd.f32 %v212, %v218
    %v221 = vadd.f32 %v220, 1e-16
    %v222 = vrsqrt.pop %v221
    %v223 = vmul.f32 %v221, %v222
    %vm224 = vcmp.eq.f32.partialorder %v221, inf
    %v225 = vsel %vm224, %v221, %v223
    %vm226 = vcmp.eq.f32.partialorder %v221, 0.0
    %v227 = vand.u32 %v221, 2147483648
    %v228 = vsel %vm226, %v227, %v225
    %v229 = vld [vmem:[#allocation8] sm:$0xf]
    %v230 = vld [vmem:[#allocation8 + $0x4] sm:$0xf]
    %v231 = vld [vmem:[#allocation8 + $0x8] sm:$0xf]
    %v232 = vld [vmem:[#allocation8 + $0xc] sm:$0xf]
    %v233 = vld [vmem:[#allocation8 + $0x10] sm:$0xf]
    %v234 = vld [vmem:[#allocation8 + $0x14] sm:$0xf]
    %v235 = vld [vmem:[#allocation8 + $0x18] sm:$0xf]
    %v236 = vld [vmem:[#allocation8 + $0x1c] sm:$0xf]
    %v237 = vld [vmem:[#allocation8 + $0x20] sm:$0xf]
    %v238 = vld [vmem:[#allocation8 + $0x24] sm:$0xf]
    %v239 = vld [vmem:[#allocation8 + $0x28] sm:$0xf]
    %v240 = vld [vmem:[#allocation8 + $0x2c] sm:$0xf]
    %v241 = vld [vmem:[#allocation8 + $0x30] sm:$0xf]
    %v242 = vld [vmem:[#allocation8 + $0x34] sm:$0xf]
    %v243 = vld [vmem:[#allocation8 + $0x38] sm:$0xf]
    %v244 = vld [vmem:[#allocation8 + $0x3c] sm:$0xf]
    %v245 = vld [vmem:[%s4] sm:$0x1]
    %v247 = vlaneseq
    %v248 = vshrl.u32 %v247, 7
    %v249 = vsub.s32 0, %v248
    %v250 = vrot.slane %v245, %v249
    %v268 = vunpack.c.l.b16 %v229
    %v269 = vunpack.c.l.b16 %v230
    %v270 = vunpack.c.l.b16 %v231
    %v271 = vunpack.c.l.b16 %v232
    %v272 = vunpack.c.l.b16 %v233
    %v273 = vunpack.c.l.b16 %v234
    %v274 = vunpack.c.l.b16 %v235
    %v275 = vunpack.c.l.b16 %v236
    %v276 = vunpack.c.l.b16 %v237
    %v277 = vunpack.c.l.b16 %v238
    %v278 = vunpack.c.l.b16 %v239
    %v279 = vunpack.c.l.b16 %v240
    %v280 = vunpack.c.l.b16 %v241
    %v281 = vunpack.c.l.b16 %v242
    %v282 = vunpack.c.l.b16 %v243
    %v283 = vunpack.c.l.b16 %v244
    %v284 = vpack.c.b16 %v269, %v268
    %v285 = vpack.c.b16 %v271, %v270
    %v286 = vpack.c.b16 %v273, %v272
    %v287 = vpack.c.b16 %v275, %v274
    %v288 = vpack.c.b16 %v277, %v276
    %v289 = vpack.c.b16 %v279, %v278
    %v290 = vpack.c.b16 %v281, %v280
    %v291 = vpack.c.b16 %v283, %v282
    %300 = vmatprep.subr.bf16.mxu0 0
    %301 = vmatpush1.bf16.xpose.msra.mxu0 %v284
    %302 = vmatprep.subr.bf16.mxu0 0
    %303 = vmatpush1.bf16.xpose.msra.mxu0 %v285
    %304 = vmatprep.subr.bf16.mxu0 0
    %305 = vmatpush1.bf16.xpose.msra.mxu0 %v286
    %306 = vmatprep.subr.bf16.mxu0 0
    %307 = vmatpush1.bf16.xpose.msra.mxu0 %v287
    %308 = vmatprep.subr.bf16.mxu0 0
    %309 = vmatpush1.bf16.xpose.msra.mxu0 %v288
    %310 = vmatprep.subr.bf16.mxu0 0
    %311 = vmatpush1.bf16.xpose.msra.mxu0 %v289
    %312 = vmatprep.subr.bf16.mxu0 0
    %313 = vmatpush1.bf16.xpose.msra.mxu0 %v290
    %314 = vmatprep.subr.bf16.mxu0 0
    %315 = vmatpush1.bf16.xpose.msra.mxu0 %v291
    %316 = vmatprep.subr.bf16.mxu0 0
    %317 = vmatpush1.bf16.xpose.msra.mxu0 0
    %318 = vmatprep.subr.bf16.mxu0 0
    %319 = vmatpush1.bf16.xpose.msra.mxu0 0
    %320 = vmatprep.subr.bf16.mxu0 0
    %321 = vmatpush1.bf16.xpose.msra.mxu0 0
    %322 = vmatprep.subr.bf16.mxu0 0
    %323 = vmatpush1.bf16.xpose.msra.mxu0 0
    %324 = vmatprep.subr.bf16.mxu0 0
    %325 = vmatpush1.bf16.xpose.msra.mxu0 0
    %326 = vmatprep.subr.bf16.mxu0 0
    %327 = vmatpush1.bf16.xpose.msra.mxu0 0
    %328 = vmatprep.subr.bf16.mxu0 0
    %329 = vmatpush1.bf16.xpose.msra.mxu0 0
    %330 = vmatprep.subr.bf16.mxu0 0
    %331 = vmatpush1.bf16.xpose.msra.mxu0 0
    %332 = vmatprep.mubr.bf16.mxu0 0
    %333 = vmatmul.mubr.bf16.gmra.mrb[0].mxu0 %v85
    %v334 = vpop.f32.mrb[0].mxu0
    %v335 = vadd.f32 %v250, %v334
    %v336 = vpop.f32.mrb[0].mxu0
    %v337 = vpop.f32.mrb[0].mxu0
    %v338 = vpop.f32.mrb[0].mxu0
    %339 = vdwg.mxu0
    %v340 = vld [vmem:[#allocation5] sm:$0xff]
    %v341 = vmul.f32 %v228, %v340
    %v342 = vadd.f32 %v335, %v341
    %343 = vst [vmem:[#allocation10] sm:$0xff] %v342
    // Predicated region
    $region50: #{tpu_custom_call.1} parent=1 // pred_check
      _
    $region51: #{tpu_custom_call.1} parent=1 // pred_check_branch
      %345 = sbr.rel (0) target = $region53
    $region52: #{tpu_custom_call.1} parent=1 // pred_region
      %s347 = ssub.s32 128, 128
      %348 = vsyncadd [#allocation4], %s347
      %s350 = sshll.u32 [#allocation10], 4
      %s351 = int_to_ptr.vmem [resolvable:$true] %s350
      %353 = dma.vmem_to_hbm [thread:$0]  %s351, 128, %s8, [#allocation4]
    $region53: #{tpu_custom_call.1} parent=1 // pred_fallthru
      _
    // Predicated region
    $region54: #{tpu_custom_call.1} parent=1 // pred_check
      _
    $region55: #{tpu_custom_call.1} parent=1 // pred_check_branch
      %355 = sbr.rel (0) target = $region57
    $region56: #{tpu_custom_call.1} parent=1 // pred_region
      _
    $region57: #{tpu_custom_call.1} parent=1 // pred_fallthru
      _
    // Predicated region
    $region58: #{tpu_custom_call.1} parent=1 // pred_check
      _
    $region59: #{tpu_custom_call.1} parent=1 // pred_check_branch
      %357 = sbr.rel (0) target = $region61
    $region60: #{tpu_custom_call.1} parent=1 // pred_region
      %358 = dma.done [#allocation4], 128
    $region61: #{tpu_custom_call.1} parent=1 // pred_fallthru
      _
    // Predicated region
    $region62: #{tpu_custom_call.1} parent=1 // pred_check
      _
    $region63: #{tpu_custom_call.1} parent=1 // pred_check_branch
      %360 = sbr.rel (0) target = $region65
    $region64: #{tpu_custom_call.1} parent=1 // pred_region
      _
    $region65: #{tpu_custom_call.1} parent=1 // pred_fallthru
      _
    %361 = vsyncpa [#allocation3], 1
    %362 = vsyncpa [#allocation6], 1
    %363 = vsyncpa [#allocation9], 1
    %364 = vsyncpa [#allocation4], 1

</llo_original>
